<compile_context>
chip_gen: v5e
topology: v5e:2x2
jax: 0.10.0
libtpu: 0.0.40
codegen_flags: <defaults>
</compile_context>

<pallas_src>
import functools

import jax
import jax.numpy as jnp
from jax.experimental import pallas as pl
from jax.experimental.pallas import tpu as pltpu


def _rim_kernel(x_ref, o_ref, *, w, l):
    # x_ref / o_ref: (nb, L) block; each row is one flattened (H, W) image.
    x = x_ref[...].astype(jnp.float32)
    f = jax.lax.broadcasted_iota(jnp.int32, x.shape, 1)   # flat index h*W + w
    col = f % w                                           # column inside image
    zero = jnp.zeros_like(x)

    # Horizontal 3-sum with a zero halo: neighbors at flat index f-1 / f+1,
    # which do not exist on the left / right image edges.
    left = jnp.where(col == 0, zero, pltpu.roll(x, shift=1, axis=1))
    right = jnp.where(col == w - 1, zero, pltpu.roll(x, shift=l - 1, axis=1))
    hs = left + x + right

    # Vertical 3-sum of hs: neighbors at f-W / f+W, missing on top/bottom rows.
    up = jnp.where(f < w, zero, pltpu.roll(hs, shift=w, axis=1))
    down = jnp.where(f >= l - w, zero, pltpu.roll(hs, shift=l - w, axis=1))
    box = up + hs + down

    # [[-1,-1,-1],[-1,8,-1],[-1,-1,-1]]  <=>  9*center - (3x3 box sum).
    o_ref[...] = (9.0 * x - box).astype(o_ref.dtype)


def _vmem_limit_bytes():
    # v5e/v6e: 128 MiB physical VMEM; v7x: 64 MiB per TensorCore.  Use ~3/4 of
    # physical, capped at 96 MiB, falling back to the v7x-safe 48 MiB if the
    # query is unavailable.
    try:
        cap = int(pltpu.get_tpu_info().vmem_capacity_bytes)
    except Exception:
        cap = 64 << 20
    return max(32 << 20, min(cap * 3 // 4, 96 << 20))


def get_rim_loose(x, *, block_images=None):
    """x: (N, 1, H, W) float -> (N, 1, H, W); same forward as the module."""
    N, C, H, W = x.shape
    assert C == 1, "GetRimLoose expects a single input channel"
    L = H * W

    x2 = x.reshape(N, L)            # free row-major reshape -> lane-dense rows
    itemsize = x2.dtype.itemsize
    sub = max(8, 32 // itemsize)                 # sublane granularity (8 f32, 16 bf16)
    lane_pad = pl.cdiv(L, 128) * 128             # lane-padded row length
    row_bytes = lane_pad * itemsize

    vmem_limit = _vmem_limit_bytes()
    if block_images is None:
        # One block must leave room for: 2x double-buffered input blocks,
        # 2x output blocks, and ~6 live block-sized temps (x, hs, rolls, box,
        # iota/masks).  Divide the limit by 12 and cap at 8 MiB (HBM roofline
        # already plateaus well below that block size).
        block_budget = min(vmem_limit // 12, 8 << 20)
        nb = max(sub, block_budget // row_bytes)
    else:
        nb = max(1, int(block_images))
    nb = min(nb, N)
    if nb < N:
        # Partial batch blocks must keep the sublane dim a multiple of 8.
        nb = min(max(sub, (nb // sub) * sub), N)

    grid = (pl.cdiv(N, nb),)        # ragged last block is masked, not shrunk
    out = pl.pallas_call(
        functools.partial(_rim_kernel, w=W, l=L),
        out_shape=jax.ShapeDtypeStruct((N, L), x2.dtype),
        grid=grid,
        in_specs=[pl.BlockSpec((nb, L), lambda i: (i, 0))],
        out_specs=pl.BlockSpec((nb, L), lambda i: (i, 0)),
        compiler_params=pltpu.CompilerParams(
            dimension_semantics=("parallel",),
            vmem_limit_bytes=vmem_limit,
        ),
    )(x2)

    return out.reshape(N, 1, H, W)


def _reference(x):
    # Pure-JAX reference with F.conv2d(padding=1) semantics (NCHW).
    weight = jnp.array([[[[-1.0, -1.0, -1.0],
                          [-1.0, 8.0, -1.0],
                          [-1.0, -1.0, -1.0]]]], dtype=jnp.float32)
    return jax.lax.conv_general_dilated(
        x, weight, window_strides=(1, 1), padding=((1, 1), (1, 1)),
        dimension_numbers=("NCHW", "OIHW", "NCHW"))


if __name__ == "__main__":
    key = jax.random.PRNGKey(0)
    k0, k1 = jax.random.split(key)

    # Primary case: whole batch fits in one block (grid = 1).
    x = jax.random.normal(k0, (2, 1, 16, 16), dtype=jnp.float32)
    y = jax.block_until_ready(get_rim_loose(x))
    assert y.shape == x.shape
    assert jnp.allclose(y, _reference(x), atol=1e-4, rtol=1e-4), "mismatch (grid=1)"

    # Multi-step + ragged batch: 20 images, 8 per block -> grid of 3 with a
    # masked partial last block.
    x2 = jax.random.normal(k1, (20, 1, 16, 16), dtype=jnp.float32)
    y2 = jax.block_until_ready(get_rim_loose(x2, block_images=8))
    assert jnp.allclose(y2, _reference(x2), atol=1e-4, rtol=1e-4), "mismatch (ragged grid)"

    print("KERNEL_OK")
</pallas_src>

<mosaic_0001>
module attributes {stable_mosaic.version = 11 : i64} {
  func.func @_rim_kernel(%arg0: i32, %arg1: memref<2x256xf32, #tpu.memory_space<vmem>>, %arg2: memref<2x256xf32, #tpu.memory_space<vmem>>) attributes {dimension_semantics = [#tpu.dimension_semantics<parallel>], iteration_bounds = array<i64: 1>, scalar_prefetch = 0 : i64, scratch_operands = 0 : i64, tpu.core_type = #tpu.core_type<tc>, window_params = [{transform_indices = @transform_0, window_bounds = array<i64: 2, 256>}, {transform_indices = @transform_1, window_bounds = array<i64: 2, 256>}]} {
    %c0 = arith.constant 0 : index
    %c0_0 = arith.constant 0 : index
    %0 = vector.load %arg1[%c0, %c0_0] : memref<2x256xf32, #tpu.memory_space<vmem>>, vector<2x256xf32>
    %1 = tpu.iota {dimensions = array<i32: 1>} : vector<2x256xi32>
    %c16_i32 = arith.constant 16 : i32
    %c0_i32 = arith.constant 0 : i32
    %2 = arith.cmpi eq, %c16_i32, %c0_i32 : i32
    %c1_i32 = arith.constant 1 : i32
    %3 = arith.select %2, %c1_i32, %c16_i32 : i32
    %4 = vector.broadcast %3 : i32 to vector<2x256xi32>
    %5 = arith.remsi %1, %4 : vector<2x256xi32>
    %c0_i32_1 = arith.constant 0 : i32
    %6 = vector.broadcast %c0_i32_1 : i32 to vector<2x256xi32>
    %7 = arith.cmpi ne, %5, %6 : vector<2x256xi32>
    %c0_i32_2 = arith.constant 0 : i32
    %8 = vector.broadcast %c0_i32_2 : i32 to vector<2x256xi32>
    %9 = arith.cmpi slt, %5, %8 : vector<2x256xi32>
    %c0_i32_3 = arith.constant 0 : i32
    %10 = arith.cmpi slt, %3, %c0_i32_3 : i32
    %11 = vector.broadcast %10 : i1 to vector<2x256xi1>
    %12 = vector.broadcast %11 : vector<2x256xi1> to vector<2x256xi1>
    %13 = arith.xori %9, %12 : vector<2x256xi1>
    %14 = arith.andi %13, %7 : vector<2x256xi1>
    %15 = vector.broadcast %3 : i32 to vector<2x256xi32>
    %16 = arith.addi %5, %15 : vector<2x256xi32>
    %17 = arith.select %14, %16, %5 : vector<2x256xi1>, vector<2x256xi32>
    %cst = arith.constant 0.000000e+00 : f32
    %18 = vector.broadcast %cst : f32 to vector<2x256xf32>
    %c0_i32_4 = arith.constant 0 : i32
    %19 = vector.broadcast %c0_i32_4 : i32 to vector<2x256xi32>
    %20 = arith.cmpi eq, %17, %19 : vector<2x256xi32>
    %c1_i32_5 = arith.constant 1 : i32
    %21 = tpu.dynamic_rotate %0 by %c1_i32_5 dim 1 : vector<2x256xf32>, i32 -> vector<2x256xf32>
    %22 = arith.select %20, %18, %21 : vector<2x256xi1>, vector<2x256xf32>
    %c15_i32 = arith.constant 15 : i32
    %23 = vector.broadcast %c15_i32 : i32 to vector<2x256xi32>
    %24 = arith.cmpi eq, %17, %23 : vector<2x256xi32>
    %c255_i32 = arith.constant 255 : i32
    %25 = tpu.dynamic_rotate %0 by %c255_i32 dim 1 : vector<2x256xf32>, i32 -> vector<2x256xf32>
    %26 = arith.select %24, %18, %25 : vector<2x256xi1>, vector<2x256xf32>
    %27 = arith.addf %22, %0 : vector<2x256xf32>
    %28 = arith.addf %27, %26 : vector<2x256xf32>
    %c16_i32_6 = arith.constant 16 : i32
    %29 = vector.broadcast %c16_i32_6 : i32 to vector<2x256xi32>
    %30 = arith.cmpi slt, %1, %29 : vector<2x256xi32>
    %c16_i32_7 = arith.constant 16 : i32
    %31 = tpu.dynamic_rotate %28 by %c16_i32_7 dim 1 : vector<2x256xf32>, i32 -> vector<2x256xf32>
    %32 = arith.select %30, %18, %31 : vector<2x256xi1>, vector<2x256xf32>
    %c240_i32 = arith.constant 240 : i32
    %33 = vector.broadcast %c240_i32 : i32 to vector<2x256xi32>
    %34 = arith.cmpi sge, %1, %33 : vector<2x256xi32>
    %c240_i32_8 = arith.constant 240 : i32
    %35 = tpu.dynamic_rotate %28 by %c240_i32_8 dim 1 : vector<2x256xf32>, i32 -> vector<2x256xf32>
    %36 = arith.select %34, %18, %35 : vector<2x256xi1>, vector<2x256xf32>
    %37 = arith.addf %32, %28 : vector<2x256xf32>
    %38 = arith.addf %37, %36 : vector<2x256xf32>
    %cst_9 = arith.constant 9.000000e+00 : f32
    %39 = vector.broadcast %cst_9 : f32 to vector<2x256xf32>
    %40 = arith.mulf %39, %0 : vector<2x256xf32>
    %41 = arith.subf %40, %38 : vector<2x256xf32>
    %c0_10 = arith.constant 0 : index
    %c0_11 = arith.constant 0 : index
    %42 = vector.load %arg2[%c0_10, %c0_11] : memref<2x256xf32, #tpu.memory_space<vmem>>, vector<2x256xf32>
    tpu.vector_store %arg2[%c0_10, %c0_11], %41 {strides = array<i32>} : memref<2x256xf32, #tpu.memory_space<vmem>>, vector<2x256xf32>,
    return
  }
  func.func @transform_0(%arg0: i32) -> (i32, i32) {
    %c0_i32 = arith.constant 0 : i32
    %c0_i32_0 = arith.constant 0 : i32
    return %arg0, %c0_i32 : i32, i32
  }
  func.func @transform_1(%arg0: i32) -> (i32, i32) {
    %c0_i32 = arith.constant 0 : i32
    %c0_i32_0 = arith.constant 0 : i32
    return %arg0, %c0_i32 : i32, i32
  }
}

</mosaic_0001>

<llo_original>
// kernel: tpu_custom_call.1
$region0: #{tpu_custom_call.1}
  #allocation0 [shape = 'u32[]', space=smem, size = 0x4, offset = 0x4, fixed_abs, tag = 'smem constant byte address 0x4 - core index']
  #allocation1 [shape = 'u32[72,128]{1,0:T(1,128)}', space=vmem, size = 0x9000, scoped, tag = 'internal scratch']
  %s0 = inlined_call_operand.hbm [shape: f32[2,256], index: 0, kind: input, shape index: {}]
  %s1 = inlined_call_operand.hbm [shape: f32[2,256], index: 1, kind: output, shape index: {}]
  %s2 = sld [smem:[#allocation0]]
  $region18: #{tpu_custom_call.1} parent=0
    _
  %s4 = ssub.s32 1, %s2
  %s5 = scalar_select 0, %s4, %s2
  $region1: #{tpu_custom_call.1} parent=0
    #allocation2 [shape = 'u8[2048]{0}', space=vmem, size = 0x800, scoped, tag = 'input window, operand 0, single buffered']
    #allocation3 [shape = 's32[1]{0}', space=sflag, size = 0x4, scoped, tag = 'scoped memory for tpu_custom_call.1']
    #allocation4 [shape = 's32[1]{0}', space=sflag, size = 0x4, scoped, tag = 'scoped memory for tpu_custom_call.1']
    #allocation5 [shape = 'u8[2048]{0}', space=vmem, size = 0x800, scoped, tag = 'output window, operand 0, single buffered']
    %6 = vsyncpa [#allocation3], 0
    %7 = vsyncpa [#allocation4], 0
    // Predicated region
    $region2: #{tpu_custom_call.1} parent=1 // pred_check
      _
    $region3: #{tpu_custom_call.1} parent=1 // pred_check_branch
      %9 = sbr.rel (0) target = $region5
    $region4: #{tpu_custom_call.1} parent=1 // pred_region
      %11 = vsyncadd [#allocation3], 0
      %s13 = sshll.u32 %s0, 4
      %s14 = int_to_ptr.hbm [resolvable:$true] %s13
      %s15 = sshll.u32 [#allocation2], 4
      %s16 = int_to_ptr.vmem [resolvable:$true] %s15
      %18 = dma.hbm_to_vmem [thread:$0]  %s14, 64, %s16, [#allocation3]
    $region5: #{tpu_custom_call.1} parent=1 // pred_fallthru
      _
    // Predicated region
    $region6: #{tpu_custom_call.1} parent=1 // pred_check
      _
    $region7: #{tpu_custom_call.1} parent=1 // pred_check_branch
      %20 = sbr.rel (0) target = $region9
    $region8: #{tpu_custom_call.1} parent=1 // pred_region
      %22 = dma.done [#allocation3], 64
    $region9: #{tpu_custom_call.1} parent=1 // pred_fallthru
      _
    %v23 = vld [vmem:[#allocation2] sm:$0xf]
    %v24 = vlaneseq
    %v25 = vand.u32 %v24, 127
    %v26 = vadd.s32 %v25, 128
    %vm27 = vcmp.lt.s32.totalorder %v25, 0
    %v28 = vsub.s32 0, %v25
    %v29 = vsel %vm27, %v28, %v25
    %v30 = vshrl.u32 %v29, 4
    %v31 = vand.u32 %v29, 15
    %v32 = vsub.s32 0, %v31
    %v33 = vsel %vm27, %v32, %v31
    %vm34 = vcmp.lt.s32.totalorder %v26, 0
    %v35 = vsub.s32 0, %v26
    %v36 = vsel %vm34, %v35, %v26
    %v37 = vshrl.u32 %v36, 4
    %v38 = vand.u32 %v36, 15
    %v39 = vsub.s32 0, %v38
    %v40 = vsel %vm34, %v39, %v38
    %vm41 = vcmp.ne.s32.totalorder %v33, 0
    %vm42 = vcmp.ne.s32.totalorder %v40, 0
    %vm43 = vcmp.lt.s32.totalorder %v33, 0
    %vm44 = vcmp.lt.s32.totalorder %v40, 0
    %vm45 = vmand %vm43, %vm41
    %vm46 = vmand %vm44, %vm42
    %v47 = vadd.s32 %v33, 16
    %v48 = vadd.s32 %v40, 16
    %v49 = vsel %vm45, %v47, %v33
    %v50 = vsel %vm46, %v48, %v40
    %vm51 = vcmp.eq.s32.totalorder %v49, 0
    %vm52 = vcmp.eq.s32.totalorder %v50, 0
    %54 = vst [vmem:[#allocation1] ss:$4 sm:$0xff] %v23
    %v55 = vld.sshfl [vmem:[#allocation1] sm:$0xff pattern:$0x73625140]
    %v56 = vld.sshfl [vmem:[#allocation1 + $0x8] sm:$0xff pattern:$0x73625140]
    %59 = vrot.lane.b32.xlu0 %v55, 1
    %v60 = vpop.permute.xlu0 %59
    %61 = vrot.lane.b32.xlu0 %v56, 1
    %v62 = vpop.permute.xlu0 %61
    %vm63 = vcmp.lt.s32.totalorder %v25, 1
    %v64 = vsel %vm63, %v60, %v62
    %v65 = vsel %vm63, %v62, %v60
    %v66 = vsel %vm51, 0.0, %v65
    %v67 = vsel %vm52, 0.0, %v64
    %vm68 = vcmp.eq.s32.totalorder %v49, 15
    %vm69 = vcmp.eq.s32.totalorder %v50, 15
    %70 = vst [vmem:[#allocation1] ss:$4 sm:$0xff] %v23
    %v71 = vld.sshfl [vmem:[#allocation1] sm:$0xff pattern:$0x73625140]
    %v72 = vld.sshfl [vmem:[#allocation1 + $0x8] sm:$0xff pattern:$0x73625140]
    %75 = vrot.lane.b32.xlu0 %v71, 127
    %v76 = vpop.permute.xlu0 %75
    %77 = vrot.lane.b32.xlu0 %v72, 127
    %v78 = vpop.permute.xlu0 %77
    %vm79 = vcmp.lt.s32.totalorder %v25, 127
    %v80 = vsel %vm79, %v76, %v78
    %v81 = vsel %vm79, %v78, %v76
    %v82 = vsel %vm68, 0.0, %v80
    %v83 = vsel %vm69, 0.0, %v81
    %84 = vst [vmem:[#allocation1] ss:$4 sm:$0xff] %v23
    %v85 = vld.sshfl [vmem:[#allocation1] sm:$0xff pattern:$0x73625140]
    %v86 = vld.sshfl [vmem:[#allocation1 + $0x8] sm:$0xff pattern:$0x73625140]
    %v89 = vadd.f32 %v66, %v85
    %v90 = vadd.f32 %v67, %v86
    %v91 = vadd.f32 %v89, %v82
    %v92 = vadd.f32 %v90, %v83
    %vm93 = vcmp.lt.s32.totalorder %v25, 16
    %vm94 = vcmp.lt.s32.totalorder %v26, 16
    %95 = vrot.lane.b32.xlu0 %v91, 16
    %v96 = vpop.permute.xlu0 %95
    %97 = vrot.lane.b32.xlu0 %v92, 16
    %v98 = vpop.permute.xlu0 %97
    %v99 = vsel %vm93, %v96, %v98
    %v100 = vsel %vm93, %v98, %v96
    %v101 = vsel %vm93, 0.0, %v100
    %v102 = vsel %vm94, 0.0, %v99
    %vm103 = vcmp.ge.s32.totalorder %v25, 240
    %vm104 = vcmp.ge.s32.totalorder %v26, 240
    %105 = vrot.lane.b32.xlu0 %v91, 112
    %v106 = vpop.permute.xlu0 %105
    %107 = vrot.lane.b32.xlu0 %v92, 112
    %v108 = vpop.permute.xlu0 %107
    %vm109 = vcmp.lt.s32.totalorder %v25, 112
    %v110 = vsel %vm109, %v106, %v108
    %v111 = vsel %vm109, %v108, %v106
    %v112 = vsel %vm103, 0.0, %v110
    %v113 = vsel %vm104, 0.0, %v111
    %v114 = vadd.f32 %v101, %v91
    %v115 = vadd.f32 %v102, %v92
    %v116 = vadd.f32 %v114, %v112
    %v117 = vadd.f32 %v115, %v113
    %v118 = vmul.f32 %v23, 9.0
    %v121 = vrot.slane %v117, 6
    %vm122 = vcmask 1041408
    %v123 = vsel %vm122, %v116, %v121
    %v125 = vsub.f32 %v118, %v123
    %126 = vst [vmem:[#allocation5] sm:$0xf] %v125
    // Predicated region
    $region10: #{tpu_custom_call.1} parent=1 // pred_check
      _
    $region11: #{tpu_custom_call.1} parent=1 // pred_check_branch
      %128 = sbr.rel (0) target = $region13
    $region12: #{tpu_custom_call.1} parent=1 // pred_region
      %130 = vsyncadd [#allocation4], 0
      %s132 = sshll.u32 [#allocation5], 4
      %s133 = int_to_ptr.vmem [resolvable:$true] %s132
      %s134 = sshll.u32 %s1, 4
      %s135 = int_to_ptr.hbm [resolvable:$true] %s134
      %137 = dma.vmem_to_hbm [thread:$0]  %s133, 64, %s135, [#allocation4]
    $region13: #{tpu_custom_call.1} parent=1 // pred_fallthru
      _
    // Predicated region
    $region14: #{tpu_custom_call.1} parent=1 // pred_check
      _
    $region15: #{tpu_custom_call.1} parent=1 // pred_check_branch
      %139 = sbr.rel (0) target = $region17
    $region16: #{tpu_custom_call.1} parent=1 // pred_region
      %141 = dma.done [#allocation4], 64
    $region17: #{tpu_custom_call.1} parent=1 // pred_fallthru
      _
    %142 = vsyncpa [#allocation3], 1
    %143 = vsyncpa [#allocation4], 1

</llo_original>
